<compile_context>
chip_gen: v5e
topology: v5e:2x2
jax: 0.10.0
libtpu: 0.0.40
codegen_flags: <defaults>
</compile_context>

<pallas_src>
import functools

import jax
import jax.numpy as jnp
from jax.experimental import pallas as pl
from jax.experimental.pallas import tpu as pltpu


_SUBLANE_PACK = {4: 8, 2: 16, 1: 32}   # sublane packing granule per itemsize


def _round_up(x, m):
    return ((x + m - 1) // m) * m


def _vmem_capacity_bytes():
    """Per-generation VMEM capacity; conservative fallback (v7x physical)."""
    try:
        return int(pltpu.get_tpu_info().vmem_capacity_bytes)
    except Exception:
        return 64 * 1024 * 1024


def _choose_tile_n(n, c, itemsize, class_major, budget_bytes):
    """Batch-tile size against an explicit VMEM working-set budget.

    Budget accounts for: 2x pipelined logits buffers, 2x pipelined targets
    buffers (with their sublane/lane padding), in-kernel f32 temporaries and
    the per-sample accumulator scratch.
    """
    if class_major:
        # Batch on the 128-lane axis, classes on sublanes.
        granule = 128
        sub = _SUBLANE_PACK.get(itemsize, 8)
        c_in = _round_up(c, sub)              # logits rows, sublane-padded
        c_f32 = _round_up(c, 8)
        per_sample = (2 * c_in * itemsize     # double-buffered logits block
                      + 2 * 8 * 4            # double-buffered (1, tile) targets
                      + 6 * c_f32 * 4        # f32 cast / exp / mask / where temps
                      + 12 * 8 * 4)          # (1, tile) row temps + accumulator
    else:
        # Batch on sublanes, classes lane-padded to 128 (only used for C >= 128).
        granule = _SUBLANE_PACK.get(itemsize, 8)
        c_in = _round_up(c, 128)
        per_sample = (2 * c_in * itemsize     # double-buffered logits block
                      + 2 * 128 * 4          # (tile, 1) targets, lane-padded
                      + 6 * c_in * 4         # f32 temporaries
                      + 4 * 128 * 4)         # (tile, 1) column temps + accumulator
    tile = (budget_bytes // per_sample // granule) * granule
    tile = max(tile, granule)
    tile = min(tile, _round_up(max(n, 1), granule))
    return int(tile), int(granule)


def _focal_loss_kernel(logits_ref, targets_ref, alpha_ref, out_ref, acc_ref, *,
                       gamma, size_average, n_total, tile_n, class_axis):
    """One batch tile.  class_axis=0 -> (C, tile_n) blocks; 1 -> (tile_n, C)."""
    i = pl.program_id(0)
    last = pl.num_programs(0) - 1

    @pl.when(i == 0)
    def _init():
        acc_ref[...] = jnp.zeros_like(acc_ref)

    x = logits_ref[...].astype(jnp.float32)     # cast in-kernel (native-dtype DMA)
    t = targets_ref[...]                         # int32, broadcastable to x
    a = alpha_ref[...].astype(jnp.float32)       # per-class weights

    # Fused "one-hot": no materialized mask array / extra multiplies.
    class_ids = jax.lax.broadcasted_iota(jnp.int32, x.shape, class_axis)
    is_tgt = class_ids == t

    # log softmax(x)[target] via log-sum-exp (no full softmax / division).
    m = jnp.max(x, axis=class_axis, keepdims=True)
    denom = jnp.sum(jnp.exp(x - m), axis=class_axis, keepdims=True)
    x_t = jnp.sum(jnp.where(is_tgt, x, 0.0), axis=class_axis, keepdims=True)
    alpha_t = jnp.sum(jnp.where(is_tgt, a, 0.0), axis=class_axis, keepdims=True)
    log_p = (x_t - m) - jnp.log(denom)
    one_minus = 1.0 - jnp.exp(log_p)

    g = float(gamma)
    if g == 2.0:                         # module default: single multiply, no pow
        focal = one_minus * one_minus
    elif g == 1.0:
        focal = one_minus
    elif g == 0.0:
        focal = jnp.ones_like(one_minus)
    else:
        focal = jnp.power(one_minus, jnp.float32(g))

    loss = -alpha_t * focal * log_p      # per-sample loss: (1,tile_n) or (tile_n,1)

    # Accumulate per-sample partials in VMEM; defer the scalar reduce.
    @pl.when(i < last)
    def _interior():
        acc_ref[...] += loss

    @pl.when(i == last)
    def _finalize():
        # Only the last tile can contain batch-padding rows -> mask only here.
        batch_axis = 1 - class_axis
        idx = jax.lax.broadcasted_iota(jnp.int32, loss.shape, batch_axis) + i * tile_n
        acc_ref[...] += jnp.where(idx < n_total, loss, 0.0)
        total = jnp.sum(acc_ref[...])
        if size_average:
            total = total / jnp.float32(n_total)
        out_ref[0, 0] = total


def focal_loss(logits, targets, alpha=None, gamma=2.0, size_average=True,
               max_tile_n=None):
    """Pallas TPU implementation of FocalLoss.forward.

    logits:  (N, C) float array (native dtype kept for DMA; cast to f32 in-kernel)
    targets: (N,)   integer class indices in [0, C)
    alpha:   optional (C,), (C, 1) or (1, C) per-class weights; default ones.
    max_tile_n: optional cap on the batch tile (testing / tuning hook).
    """
    n, c = logits.shape
    itemsize = jnp.dtype(logits.dtype).itemsize

    if alpha is None:
        alpha = jnp.ones((c,), dtype=jnp.float32)       # torch.ones(class_num, 1)
    alpha = jnp.asarray(alpha, dtype=jnp.float32).reshape(-1)
    targets = jnp.asarray(targets).reshape(-1).astype(jnp.int32)

    # Per-generation VMEM budgeting (v5e/v6e: 128 MiB, v7x: 64 MiB physical).
    cap = _vmem_capacity_bytes()
    budget = min((cap * 2) // 5, 48 * 1024 * 1024)       # pipelined working set
    vmem_limit = int(min((cap * 3) // 4, 100 * 1024 * 1024))

    class_major = c < 128                                 # small-C lane packing
    tile_n, granule = _choose_tile_n(n, c, itemsize, class_major, budget)
    if max_tile_n is not None:
        tile_n = max(granule, (min(tile_n, int(max_tile_n)) // granule) * granule)

    n_pad = _round_up(n, tile_n)
    num_tiles = n_pad // tile_n
    if n_pad != n:
        logits = jnp.pad(logits, ((0, n_pad - n), (0, 0)))
        targets = jnp.pad(targets, ((0, n_pad - n),))

    if class_major:
        # Lane-dense layout for small C: batch on the 128-lane axis, classes on
        # sublanes.  The wrapper transpose is layout plumbing, not compute.
        logits_in = jnp.transpose(logits)                 # (C, n_pad)
        targets_in = targets.reshape(1, n_pad)            # lane-dense targets
        alpha_in = alpha.reshape(c, 1)
        in_specs = [
            pl.BlockSpec((c, tile_n), lambda i: (0, i)),   # logits tile
            pl.BlockSpec((1, tile_n), lambda i: (0, i)),   # targets tile
            pl.BlockSpec((c, 1), lambda i: (0, 0)),        # alpha (resident)
        ]
        scratch_shapes = [pltpu.VMEM((1, tile_n), jnp.float32)]
        class_axis = 0
    else:
        logits_in = logits                                 # (n_pad, C)
        targets_in = targets.reshape(n_pad, 1)
        alpha_in = alpha.reshape(1, c)
        in_specs = [
            pl.BlockSpec((tile_n, c), lambda i: (i, 0)),
            pl.BlockSpec((tile_n, 1), lambda i: (i, 0)),
            pl.BlockSpec((1, c), lambda i: (0, 0)),
        ]
        scratch_shapes = [pltpu.VMEM((tile_n, 1), jnp.float32)]
        class_axis = 1

    kernel = functools.partial(
        _focal_loss_kernel,
        gamma=float(gamma),
        size_average=bool(size_average),
        n_total=int(n),
        tile_n=int(tile_n),
        class_axis=class_axis,
    )

    out = pl.pallas_call(
        kernel,
        out_shape=jax.ShapeDtypeStruct((1, 1), jnp.float32),
        grid=(num_tiles,),
        in_specs=in_specs,
        out_specs=pl.BlockSpec(memory_space=pltpu.SMEM),   # scalar loss
        scratch_shapes=scratch_shapes,
        compiler_params=pltpu.CompilerParams(
            dimension_semantics=("arbitrary",),
            vmem_limit_bytes=vmem_limit,
        ),
    )(logits_in, targets_in, alpha_in)
    return out[0, 0]


def _focal_loss_ref(logits, targets, alpha=None, gamma=2.0, size_average=True):
    """Pure-JAX reference mirroring the PyTorch module."""
    n, c = logits.shape
    if alpha is None:
        alpha = jnp.ones((c,), dtype=jnp.float32)
    alpha = jnp.asarray(alpha, dtype=jnp.float32).reshape(-1)
    p = jax.nn.softmax(logits.astype(jnp.float32), axis=1)
    mask = jax.nn.one_hot(targets, c, dtype=jnp.float32)
    probs = jnp.sum(p * mask, axis=1)
    alpha_t = alpha[targets]
    batch_loss = -alpha_t * (1.0 - probs) ** gamma * jnp.log(probs)
    return jnp.mean(batch_loss) if size_average else jnp.sum(batch_loss)


if __name__ == "__main__":
    key = jax.random.PRNGKey(0)
    ks = jax.random.split(key, 8)

    # Case 1: f32, N=8, C=4, default alpha, size_average=True
    #         -> lane-packed (class-major) path, single tile.
    logits1 = jax.random.normal(ks[0], (8, 4), dtype=jnp.float32)
    targets1 = jax.random.randint(ks[1], (8,), 0, 4, dtype=jnp.int32)
    out1 = jax.block_until_ready(focal_loss(logits1, targets1))
    ref1 = _focal_loss_ref(logits1, targets1)
    assert jnp.allclose(out1, ref1, rtol=2e-5, atol=2e-5), (out1, ref1)

    # Case 2: bf16, N=13, C=5, non-uniform alpha, size_average=False
    #         -> native-dtype DMA + batch-padding mask.
    logits2 = jax.random.normal(ks[2], (13, 5), dtype=jnp.float32).astype(jnp.bfloat16)
    targets2 = jax.random.randint(ks[3], (13,), 0, 5, dtype=jnp.int32)
    alpha2 = jnp.linspace(0.5, 1.5, 5, dtype=jnp.float32)
    out2 = jax.block_until_ready(
        focal_loss(logits2, targets2, alpha=alpha2, size_average=False))
    ref2 = _focal_loss_ref(logits2, targets2, alpha=alpha2, size_average=False)
    assert jnp.allclose(out2, ref2, rtol=2e-5, atol=2e-4), (out2, ref2)

    # Case 3: f32, N=300, C=4, mean, forced tile_n=128 -> 3-step grid:
    #         exercises the cross-tile VMEM accumulator + last-tile masking.
    logits3 = jax.random.normal(ks[4], (300, 4), dtype=jnp.float32)
    targets3 = jax.random.randint(ks[5], (300,), 0, 4, dtype=jnp.int32)
    out3 = jax.block_until_ready(focal_loss(logits3, targets3, max_tile_n=128))
    ref3 = _focal_loss_ref(logits3, targets3)
    assert jnp.allclose(out3, ref3, rtol=5e-5, atol=5e-5), (out3, ref3)

    # Case 4: f32, N=40, C=256, sum, forced tile_n=16 -> row-major (C >= 128)
    #         path with a 3-step grid and batch padding.
    logits4 = jax.random.normal(ks[6], (40, 256), dtype=jnp.float32)
    targets4 = jax.random.randint(ks[7], (40,), 0, 256, dtype=jnp.int32)
    out4 = jax.block_until_ready(
        focal_loss(logits4, targets4, size_average=False, max_tile_n=16))
    ref4 = _focal_loss_ref(logits4, targets4, size_average=False)
    assert jnp.allclose(out4, ref4, rtol=5e-5, atol=1e-3), (out4, ref4)

    print("KERNEL_OK")
</pallas_src>

<mosaic_0001>
module attributes {stable_mosaic.version = 11 : i64} {
  func.func @_focal_loss_kernel(%arg0: i32, %arg1: memref<4x128xf32, #tpu.memory_space<vmem>>, %arg2: memref<1x128xi32, #tpu.memory_space<vmem>>, %arg3: memref<4x1xf32, #tpu.memory_space<vmem>>, %arg4: memref<1x1xf32, #tpu.memory_space<smem>>, %arg5: memref<1x128xf32, #tpu.memory_space<vmem>>) attributes {dimension_semantics = [#tpu.dimension_semantics<arbitrary>], iteration_bounds = array<i64: 1>, scalar_prefetch = 0 : i64, scratch_operands = 1 : i64, tpu.core_type = #tpu.core_type<tc>, window_params = [{transform_indices = @transform_0, window_bounds = array<i64: 4, 128>}, {transform_indices = @transform_1, window_bounds = array<i64: 1, 128>}, {pipeline_mode = #tpu.pipeline_mode<synchronous>, transform_indices = @transform_2, window_bounds = array<i64: 4, 1>}, {transform_indices = @transform_3, window_bounds = array<i64: 1, 1>}]} {
    %c0_i32 = arith.constant 0 : i32
    %0 = arith.cmpi eq, %arg0, %c0_i32 : i32
    %1 = arith.extui %0 : i1 to i32
    %c0_i32_0 = arith.constant 0 : i32
    %2 = arith.cmpi ne, %1, %c0_i32_0 : i32
    scf.if %2 {
      %cst_17 = arith.constant 0.000000e+00 : f32
      %43 = vector.broadcast %cst_17 : f32 to vector<1x128xf32>
      %c0_18 = arith.constant 0 : index
      %c0_19 = arith.constant 0 : index
      %44 = vector.load %arg5[%c0_18, %c0_19] : memref<1x128xf32, #tpu.memory_space<vmem>>, vector<1x128xf32>
      tpu.vector_store %arg5[%c0_18, %c0_19], %43 {strides = array<i32>} : memref<1x128xf32, #tpu.memory_space<vmem>>, vector<1x128xf32>,
    } else {
    }
    %c0 = arith.constant 0 : index
    %c0_1 = arith.constant 0 : index
    %3 = vector.load %arg1[%c0, %c0_1] : memref<4x128xf32, #tpu.memory_space<vmem>>, vector<4x128xf32>
    %c0_2 = arith.constant 0 : index
    %c0_3 = arith.constant 0 : index
    %4 = vector.load %arg2[%c0_2, %c0_3] : memref<1x128xi32, #tpu.memory_space<vmem>>, vector<1x128xi32>
    %c0_4 = arith.constant 0 : index
    %c0_5 = arith.constant 0 : index
    %5 = vector.load %arg3[%c0_4, %c0_5] : memref<4x1xf32, #tpu.memory_space<vmem>>, vector<4x1xf32>
    %6 = tpu.iota {dimensions = array<i32: 0>} : vector<4x128xi32>
    %7 = vector.broadcast %4 : vector<1x128xi32> to vector<4x128xi32>
    %8 = arith.cmpi eq, %6, %7 : vector<4x128xi32>
    %cst = arith.constant dense<0xFF800000> : vector<128xf32>
    %9 = vector.multi_reduction <maximumf>, %3, %cst [0] : vector<4x128xf32> to vector<128xf32>
    %10 = vector.shape_cast %9 : vector<128xf32> to vector<1x128xf32>
    %11 = vector.broadcast %10 : vector<1x128xf32> to vector<4x128xf32>
    %12 = arith.subf %3, %11 : vector<4x128xf32>
    %13 = math.exp %12 : vector<4x128xf32>
    %cst_6 = arith.constant dense<0.000000e+00> : vector<128xf32>
    %14 = vector.multi_reduction <add>, %13, %cst_6 [0] : vector<4x128xf32> to vector<128xf32>
    %15 = vector.shape_cast %14 : vector<128xf32> to vector<1x128xf32>
    %cst_7 = arith.constant 0.000000e+00 : f32
    %16 = vector.broadcast %cst_7 : f32 to vector<4x128xf32>
    %17 = arith.select %8, %3, %16 : vector<4x128xi1>, vector<4x128xf32>
    %cst_8 = arith.constant dense<0.000000e+00> : vector<128xf32>
    %18 = vector.multi_reduction <add>, %17, %cst_8 [0] : vector<4x128xf32> to vector<128xf32>
    %19 = vector.shape_cast %18 : vector<128xf32> to vector<1x128xf32>
    %cst_9 = arith.constant 0.000000e+00 : f32
    %20 = vector.shape_cast %5 : vector<4x1xf32> to vector<4x1xf32>
    %21 = vector.broadcast %20 : vector<4x1xf32> to vector<4x128xf32>
    %22 = vector.broadcast %cst_9 : f32 to vector<4x128xf32>
    %23 = arith.select %8, %21, %22 : vector<4x128xi1>, vector<4x128xf32>
    %cst_10 = arith.constant dense<0.000000e+00> : vector<128xf32>
    %24 = vector.multi_reduction <add>, %23, %cst_10 [0] : vector<4x128xf32> to vector<128xf32>
    %25 = vector.shape_cast %24 : vector<128xf32> to vector<1x128xf32>
    %26 = arith.subf %19, %10 : vector<1x128xf32>
    %27 = math.log %15 : vector<1x128xf32>
    %28 = arith.subf %26, %27 : vector<1x128xf32>
    %29 = math.exp %28 : vector<1x128xf32>
    %cst_11 = arith.constant 1.000000e+00 : f32
    %30 = vector.broadcast %cst_11 : f32 to vector<1x128xf32>
    %31 = arith.subf %30, %29 : vector<1x128xf32>
    %32 = arith.mulf %31, %31 : vector<1x128xf32>
    %cst_12 = arith.constant 0.000000e+00 : f32
    %33 = vector.broadcast %cst_12 : f32 to vector<1x128xf32>
    %34 = arith.subf %33, %25 : vector<1x128xf32>
    %35 = arith.mulf %34, %32 : vector<1x128xf32>
    %36 = arith.mulf %35, %28 : vector<1x128xf32>
    %c0_i32_13 = arith.constant 0 : i32
    %37 = arith.cmpi slt, %arg0, %c0_i32_13 : i32
    %38 = arith.extui %37 : i1 to i32
    %c0_i32_14 = arith.constant 0 : i32
    %39 = arith.cmpi ne, %38, %c0_i32_14 : i32
    scf.if %39 {
      %c0_17 = arith.constant 0 : index
      %c0_18 = arith.constant 0 : index
      %43 = vector.load %arg5[%c0_17, %c0_18] : memref<1x128xf32, #tpu.memory_space<vmem>>, vector<1x128xf32>
      %44 = arith.addf %43, %36 : vector<1x128xf32>
      %c0_19 = arith.constant 0 : index
      %c0_20 = arith.constant 0 : index
      %45 = vector.load %arg5[%c0_19, %c0_20] : memref<1x128xf32, #tpu.memory_space<vmem>>, vector<1x128xf32>
      tpu.vector_store %arg5[%c0_19, %c0_20], %44 {strides = array<i32>} : memref<1x128xf32, #tpu.memory_space<vmem>>, vector<1x128xf32>,
    } else {
    }
    %c0_i32_15 = arith.constant 0 : i32
    %40 = arith.cmpi eq, %arg0, %c0_i32_15 : i32
    %41 = arith.extui %40 : i1 to i32
    %c0_i32_16 = arith.constant 0 : i32
    %42 = arith.cmpi ne, %41, %c0_i32_16 : i32
    scf.if %42 {
      %43 = tpu.iota {dimensions = array<i32: 1>} : vector<1x128xi32>
      %c128_i32 = arith.constant 128 : i32
      %44 = arith.muli %arg0, %c128_i32 : i32
      %45 = vector.broadcast %44 : i32 to vector<1x128xi32>
      %46 = arith.addi %43, %45 : vector<1x128xi32>
      %c0_17 = arith.constant 0 : index
      %c0_18 = arith.constant 0 : index
      %47 = vector.load %arg5[%c0_17, %c0_18] : memref<1x128xf32, #tpu.memory_space<vmem>>, vector<1x128xf32>
      %c8_i32 = arith.constant 8 : i32
      %48 = vector.broadcast %c8_i32 : i32 to vector<1x128xi32>
      %49 = arith.cmpi slt, %46, %48 : vector<1x128xi32>
      %cst_19 = arith.constant 0.000000e+00 : f32
      %50 = vector.broadcast %cst_19 : f32 to vector<1x128xf32>
      %51 = arith.select %49, %36, %50 : vector<1x128xi1>, vector<1x128xf32>
      %52 = arith.addf %47, %51 : vector<1x128xf32>
      %c0_20 = arith.constant 0 : index
      %c0_21 = arith.constant 0 : index
      %53 = vector.load %arg5[%c0_20, %c0_21] : memref<1x128xf32, #tpu.memory_space<vmem>>, vector<1x128xf32>
      tpu.vector_store %arg5[%c0_20, %c0_21], %52 {strides = array<i32>} : memref<1x128xf32, #tpu.memory_space<vmem>>, vector<1x128xf32>,
      %c0_22 = arith.constant 0 : index
      %c0_23 = arith.constant 0 : index
      %54 = vector.load %arg5[%c0_22, %c0_23] : memref<1x128xf32, #tpu.memory_space<vmem>>, vector<1x128xf32>
      %55 = vector.shape_cast %54 : vector<1x128xf32> to vector<1x1x128xf32>
      %cst_24 = arith.constant dense<0.000000e+00> : vector<1xf32>
      %56 = vector.multi_reduction <add>, %55, %cst_24 [1, 2] : vector<1x1x128xf32> to vector<1xf32>
      %57 = vector.shape_cast %56 : vector<1xf32> to vector<1x1x1xf32>
      %58 = vector.extract %57[0, 0, 0] : f32 from vector<1x1x1xf32>
      %cst_25 = arith.constant 8.000000e+00 : f32
      %59 = arith.divf %58, %cst_25 : f32
      %c0_26 = arith.constant 0 : index
      %c0_27 = arith.constant 0 : index
      %60 = memref.load %arg4[%c0_26, %c0_27] : memref<1x1xf32, #tpu.memory_space<smem>>
      memref.store %59, %arg4[%c0_26, %c0_27] : memref<1x1xf32, #tpu.memory_space<smem>>
    } else {
    }
    return
  }
  func.func @transform_0(%arg0: i32) -> (i32, i32) {
    %c0_i32 = arith.constant 0 : i32
    %c0_i32_0 = arith.constant 0 : i32
    return %c0_i32, %arg0 : i32, i32
  }
  func.func @transform_1(%arg0: i32) -> (i32, i32) {
    %c0_i32 = arith.constant 0 : i32
    %c0_i32_0 = arith.constant 0 : i32
    return %c0_i32, %arg0 : i32, i32
  }
  func.func @transform_2(%arg0: i32) -> (i32, i32) {
    %c0_i32 = arith.constant 0 : i32
    %c0_i32_0 = arith.constant 0 : i32
    %c0_i32_1 = arith.constant 0 : i32
    return %c0_i32, %c0_i32_0 : i32, i32
  }
  func.func @transform_3(%arg0: i32) -> (i32, i32) {
    %c0_i32 = arith.constant 0 : i32
    %c0_i32_0 = arith.constant 0 : i32
    %c0_i32_1 = arith.constant 0 : i32
    return %c0_i32, %c0_i32_0 : i32, i32
  }
}

</mosaic_0001>

<llo_original>
// kernel: tpu_custom_call.1
$region0: #{tpu_custom_call.1}
  #allocation0 [shape = 'u32[]', space=smem, size = 0x4, offset = 0x4, fixed_abs, tag = 'smem constant byte address 0x4 - core index']
  #allocation1 [shape = 'u32[72,128]{1,0:T(1,128)}', space=vmem, size = 0x9000, scoped, tag = 'internal scratch']
  #allocation2 [shape = 'f32[1,128]{1,0:T(1,128)}', space=vmem, size = 0x200, scoped, tag = 'scratch operand']
  %s0 = inlined_call_operand.vmem [shape: f32[4,128], index: 0, kind: input, shape index: {}]
  %s1 = inlined_call_operand.vmem [shape: s32[1,128], index: 1, kind: input, shape index: {}]
  %s2 = inlined_call_operand.vmem [shape: f32[4,1], index: 2, kind: input, shape index: {}]
  %s3 = inlined_call_operand.hbm [shape: f32[1,1], index: 3, kind: output, shape index: {}]
  %s4 = sld [smem:[#allocation0]]
  $region34: #{tpu_custom_call.1} parent=0
    _
  %s6 = ssub.s32 1, %s4
  %s7 = scalar_select 0, %s6, %s4
  $region1: #{tpu_custom_call.1} parent=0
    #allocation3 [shape = 'u8[512]{0}', space=smem, size = 0x200, scoped, tag = 'output window, operand 0, single buffered']
    #allocation4 [shape = 's32[1]{0}', space=sflag, size = 0x4, scoped, tag = 'scoped memory for tpu_custom_call.1']
    %8 = vsyncpa [#allocation4], 0
    // Predicated region
    $region2: #{tpu_custom_call.1} parent=1 // pred_check
      _
    $region3: #{tpu_custom_call.1} parent=1 // pred_check_branch
      %10 = sbr.rel (0) target = $region5
    $region4: #{tpu_custom_call.1} parent=1 // pred_region
      _
    $region5: #{tpu_custom_call.1} parent=1 // pred_fallthru
      _
    // Predicated region
    $region6: #{tpu_custom_call.1} parent=1 // pred_check
      _
    $region7: #{tpu_custom_call.1} parent=1 // pred_check_branch
      %12 = sbr.rel (0) target = $region9
    $region8: #{tpu_custom_call.1} parent=1 // pred_region
      _
    $region9: #{tpu_custom_call.1} parent=1 // pred_fallthru
      _
    // Predicated region
    $region10: #{tpu_custom_call.1} parent=1 // pred_check
      _
    $region11: #{tpu_custom_call.1} parent=1 // pred_check_branch
      %14 = sbr.rel (0) target = $region13
    $region12: #{tpu_custom_call.1} parent=1 // pred_region
      _
    $region13: #{tpu_custom_call.1} parent=1 // pred_fallthru
      _
    %p15 = scmp.eq.s32.totalorder 0, 0
    // Predicated region
    $region14: #{tpu_custom_call.1} parent=1 // pred_check
      %p16 = pneg %p15
    $region15: #{tpu_custom_call.1} parent=1 // pred_check_branch
      %18 = sbr.rel (%p16) target = $region17
    $region16: #{tpu_custom_call.1} parent=1 // pred_region
      %19 = vst [vmem:[#allocation2] sm:$0x1] 0.0
    $region17: #{tpu_custom_call.1} parent=1 // pred_fallthru
      _
    %v20 = vld [vmem:[%s0] sm:$0xf]
    %v21 = vld [vmem:[%s1] sm:$0x1]
    %v22 = vld [vmem:[%s2] sm:$0xf]
    %v23 = vlaneseq
    %v24 = vshrl.u32 %v23, 7
    %v25 = vperm.slane %v21, 0
    %vm26 = vcmp.eq.s32.totalorder %v24, %v25
    %vm27 = vcmask 1043456
    %v28 = vsel %vm27, %v20, -inf
    %v29 = vrot.slane %v28, 4
    %v30 = vmax.f32 %v28, %v29
    %v31 = vrot.slane %v30, 2
    %v32 = vmax.f32 %v30, %v31
    %v33 = vrot.slane %v32, 1
    %v34 = vmax.f32 %v32, %v33
    %v35 = vsub.f32 %v20, %v34
    %v36 = vmul.f32 %v35, 1.442695
    %v37 = vpow.pop %v36
    %v38 = vsel %vm27, %v37, 0.0
    %v39 = vrot.slane %v38, 4
    %v40 = vadd.f32 %v38, %v39
    %v41 = vrot.slane %v40, 2
    %v42 = vadd.f32 %v40, %v41
    %v43 = vrot.slane %v42, 1
    %v44 = vadd.f32 %v42, %v43
    %v45 = vsel %vm26, %v20, 0.0
    %v46 = vsel %vm27, %v45, 0.0
    %v47 = vrot.slane %v46, 4
    %v48 = vadd.f32 %v46, %v47
    %v49 = vrot.slane %v48, 2
    %v50 = vadd.f32 %v48, %v49
    %v51 = vrot.slane %v50, 1
    %v52 = vadd.f32 %v50, %v51
    %54 = vset.pattern.permute.xlu0 0
    %55 = vperm.xlu0 %54, %v22
    %v56 = vpop.permute.xlu0 %55
    %v58 = vsel %vm26, %v56, 0.0
    %v59 = vsel %vm27, %v58, 0.0
    %v60 = vrot.slane %v59, 4
    %v61 = vadd.f32 %v59, %v60
    %v62 = vrot.slane %v61, 2
    %v63 = vadd.f32 %v61, %v62
    %v64 = vrot.slane %v63, 1
    %v65 = vadd.f32 %v63, %v64
    %v66 = vsub.f32 %v52, %v34
    %v67 = vlog2.pop %v44
    %v68 = vmul.f32 %v67, 0.6931472
    %v69 = vsub.f32 %v66, %v68
    %v70 = vmul.f32 %v69, 1.442695
    %v71 = vpow.pop %v70
    %v72 = vsub.f32 1.0, %v71
    %v73 = vmul.f32 %v72, %v72
    %v74 = vsub.f32 0.0, %v65
    %v75 = vmul.f32 %v74, %v73
    %v76 = vmul.f32 %v75, %v69
    %p77 = scmp.lt.s32.totalorder 0, 0
    // Predicated region
    $region18: #{tpu_custom_call.1} parent=1 // pred_check
      %p78 = pneg %p77
    $region19: #{tpu_custom_call.1} parent=1 // pred_check_branch
      %80 = sbr.rel (%p78) target = $region21
    $region20: #{tpu_custom_call.1} parent=1 // pred_region
      %v81 = vld [vmem:[#allocation2] sm:$0x1]
      %v82 = vadd.f32 %v81, %v76
      %83 = vst [vmem:[#allocation2] sm:$0x1] %v82
    $region21: #{tpu_custom_call.1} parent=1 // pred_fallthru
      _
    // Predicated region
    $region22: #{tpu_custom_call.1} parent=1 // pred_check
      %p84 = pneg %p15
    $region23: #{tpu_custom_call.1} parent=1 // pred_check_branch
      %86 = sbr.rel (%p84) target = $region25
    $region24: #{tpu_custom_call.1} parent=1 // pred_region
      %v87 = vlaneseq
      %v88 = vand.u32 %v87, 127
      %s89 = smul.u32 0, 128
      %v90 = vstv %s89
      %v91 = vadd.s32 %v88, %v90
      %v92 = vld [vmem:[#allocation2] sm:$0x1]
      %vm93 = vcmp.lt.s32.totalorder %v91, 8
      %v94 = vsel %vm93, %v76, 0.0
      %v95 = vadd.f32 %v92, %v94
      %96 = vst [vmem:[#allocation2] sm:$0x1] %v95
      %v97 = vld [vmem:[#allocation2] sm:$0x1]
      %vm98 = vcmask 1040384
      %v99 = vsel %vm98, %v97, 0.0
      %100 = vadd.xlane.f32.xlu0 %v99
      %v101 = vpop.xlane.xlu0 %100
      %v102 = vrot.slane %v101, 4
      %v103 = vadd.f32 %v101, %v102
      %v104 = vrot.slane %v103, 2
      %v105 = vadd.f32 %v103, %v104
      %v106 = vrot.slane %v105, 1
      %v107 = vadd.f32 %v105, %v106
      %s108 = vtos %v107
      %v109 = vrcp.pop 8.0
      %v110 = vmul.f32 8.0, %v109
      %v111 = vsub.f32 1.0, %v110
      %v112 = vmul.f32 %v109, %v111
      %v113 = vadd.f32 %v109, %v112
      %vm114 = vweird.f32 %v109
      %v115 = vsel %vm114, %v109, %v113
      %s116 = vtos %v115
      %s117 = smul.f32 %s108, %s116
      %s118 = scalar_lea.smem [#allocation3], 0
      %119 = sst [smem:[%s118]] %s117
    $region25: #{tpu_custom_call.1} parent=1 // pred_fallthru
      _
    // Predicated region
    $region26: #{tpu_custom_call.1} parent=1 // pred_check
      _
    $region27: #{tpu_custom_call.1} parent=1 // pred_check_branch
      %121 = sbr.rel (0) target = $region29
    $region28: #{tpu_custom_call.1} parent=1 // pred_region
      %123 = vsyncadd [#allocation4], 0
      %s125 = sshll.u32 %s3, 4
      %s126 = int_to_ptr.hbm [resolvable:$true] %s125
      %128 = dma.smem_to_hbm [#allocation3], 16, %s126, [#allocation4]
    $region29: #{tpu_custom_call.1} parent=1 // pred_fallthru
      _
    // Predicated region
    $region30: #{tpu_custom_call.1} parent=1 // pred_check
      _
    $region31: #{tpu_custom_call.1} parent=1 // pred_check_branch
      %130 = sbr.rel (0) target = $region33
    $region32: #{tpu_custom_call.1} parent=1 // pred_region
      %132 = dma.done [#allocation4], 16
    $region33: #{tpu_custom_call.1} parent=1 // pred_fallthru
      _
    %133 = sfence
    %134 = vsyncpa [#allocation4], 1

</llo_original>
